<compile_context>
chip_gen: v7x
topology: tpu7x:2x2x1
jax: 0.10.0
libtpu: 0.0.40
codegen_flags: <defaults>
</compile_context>

<pallas_src>
import functools
import math

import jax
import jax.numpy as jnp
from jax import lax
from jax.experimental import pallas as pl
from jax.experimental.pallas import tpu as pltpu


# ----------------------------------------------------------------------------
# helpers
# ----------------------------------------------------------------------------
def _pick_tile(n, target, quantum):
    """Largest multiple of `quantum` that divides n and is <= target; else n (full)."""
    if n <= target:
        return n
    t = (target // quantum) * quantum
    while t >= quantum:
        if n % t == 0:
            return t
        t -= quantum
    return n


# ----------------------------------------------------------------------------
# Tiled linear kernel: y = x @ W^T + b   (W^T pre-transposed / pre-cast outside)
# ----------------------------------------------------------------------------
def _linear_kernel(x_ref, wt_ref, b_ref, o_ref):
    x = x_ref[...].astype(wt_ref.dtype)                     # bf16 MXU inputs
    acc = jnp.dot(x, wt_ref[...], preferred_element_type=jnp.float32)
    o_ref[...] = (acc + b_ref[...]).astype(o_ref.dtype)     # fused bias epilogue


def linear(x, wt, b, *, out_dtype):
    """x: (N, din), wt: (din, dout) [compute dtype], b: (dout,) fp32 -> (N, dout)."""
    N, din = x.shape
    dout = wt.shape[1]
    tm = _pick_tile(N, 512, 8)                              # row tile, 'parallel'
    b2 = b.reshape(1, dout).astype(jnp.float32)
    return pl.pallas_call(
        _linear_kernel,
        out_shape=jax.ShapeDtypeStruct((N, dout), out_dtype),
        grid=(N // tm,),
        in_specs=[
            pl.BlockSpec((tm, din), lambda i: (i, 0)),
            pl.BlockSpec((din, dout), lambda i: (0, 0)),    # weight stays resident
            pl.BlockSpec((1, dout), lambda i: (0, 0)),
        ],
        out_specs=pl.BlockSpec((tm, dout), lambda i: (i, 0)),
        compiler_params=pltpu.CompilerParams(
            dimension_semantics=("parallel",)),
    )(x, wt, b2)


# ----------------------------------------------------------------------------
# Flash-attention kernel (all heads of one batch per grid step)
# ----------------------------------------------------------------------------
def _flash_attn_kernel(q_ref, k_ref, v_ref, am_ref, kpm_ref, o_ref,
                       m_scr, l_scr, acc_scr, *, scale):
    j = pl.program_id(2)

    @pl.when(j == 0)
    def _init():
        m_scr[...] = jnp.full(m_scr.shape, -1e30, jnp.float32)
        l_scr[...] = jnp.zeros(l_scr.shape, jnp.float32)
        acc_scr[...] = jnp.zeros(acc_scr.shape, jnp.float32)

    q = q_ref[0]                                            # (H, tq, D)
    k = k_ref[0]                                            # (H, tk, D)
    v = v_ref[0]                                            # (H, tk, D)

    # s[h, q, kk] = sum_d q[h,q,d] * k[h,kk,d]   (no explicit transpose)
    s = lax.dot_general(q, k, dimension_numbers=(((2,), (2,)), ((0,), (0,))),
                        preferred_element_type=jnp.float32)  # (H, tq, tk) fp32
    s = s * scale                                            # folded query scaling
    s = s + am_ref[...][None, :, :]                          # (T,S) attn mask tile
    s = s + kpm_ref[...]                                     # (1,1,tk) key padding

    m_prev = m_scr[...]                                      # (H, tq, 1)
    m_new = jnp.maximum(m_prev, jnp.max(s, axis=-1, keepdims=True))
    alpha = jnp.exp(m_prev - m_new)
    p = jnp.exp(s - m_new)                                   # (H, tq, tk) fp32
    l_scr[...] = alpha * l_scr[...] + jnp.sum(p, axis=-1, keepdims=True)
    pv = lax.dot_general(p.astype(v.dtype), v,
                         dimension_numbers=(((2,), (1,)), ((0,), (0,))),
                         preferred_element_type=jnp.float32)  # (H, tq, D)
    acc_scr[...] = alpha * acc_scr[...] + pv
    m_scr[...] = m_new

    @pl.when(j == pl.num_programs(2) - 1)
    def _finalize():
        inv_l = pl.reciprocal(l_scr[...], approx=True)       # EUP slot, ~free
        o_ref[0] = (acc_scr[...] * inv_l).astype(o_ref.dtype)


def flash_attention(q, k, v, attn_mask, kpm, scale, *, tq_target=128, tk_target=256):
    """q: (B,H,T,D), k/v: (B,H,S,D), attn_mask: (T,S) fp32, kpm: (B,1,S) fp32."""
    B, H, T, D = q.shape
    S = k.shape[2]
    tq = _pick_tile(T, tq_target, 8)
    tk = _pick_tile(S, tk_target, 128)
    kernel = functools.partial(_flash_attn_kernel, scale=scale)
    return pl.pallas_call(
        kernel,
        out_shape=jax.ShapeDtypeStruct((B, H, T, D), q.dtype),
        grid=(B, T // tq, S // tk),
        in_specs=[
            pl.BlockSpec((1, H, tq, D), lambda b, i, j: (b, 0, i, 0)),
            pl.BlockSpec((1, H, tk, D), lambda b, i, j: (b, 0, j, 0)),
            pl.BlockSpec((1, H, tk, D), lambda b, i, j: (b, 0, j, 0)),
            pl.BlockSpec((tq, tk), lambda b, i, j: (i, j)),
            pl.BlockSpec((1, 1, tk), lambda b, i, j: (b, 0, j)),
        ],
        out_specs=pl.BlockSpec((1, H, tq, D), lambda b, i, j: (b, 0, i, 0)),
        scratch_shapes=[
            pltpu.VMEM((H, tq, 1), jnp.float32),   # running max
            pltpu.VMEM((H, tq, 1), jnp.float32),   # running sum
            pltpu.VMEM((H, tq, D), jnp.float32),   # output accumulator
        ],
        compiler_params=pltpu.CompilerParams(
            dimension_semantics=("parallel", "parallel", "arbitrary"),
            vmem_limit_bytes=32 * 1024 * 1024),
    )(q, k, v, attn_mask, kpm)


# ----------------------------------------------------------------------------
# MultiheadAttention wrapper (parameter setup + glue in plain JAX)
# ----------------------------------------------------------------------------
class MultiheadAttentionPallas:
    def __init__(self, embed_dim, num_heads, key, dropout=0.0, bias=True,
                 compute_dtype=jnp.bfloat16):
        assert embed_dim % num_heads == 0
        self.embed_dim = embed_dim
        self.num_heads = num_heads
        self.dropout = dropout
        self.compute_dtype = compute_dtype
        E = embed_dim
        k1, k2 = jax.random.split(key, 2)

        # xavier_uniform_ on (3E, E): bound = sqrt(6 / (fan_in + fan_out))
        bound = math.sqrt(6.0 / (3 * E + E))
        self.in_proj_weight = jax.random.uniform(
            k1, (3 * E, E), jnp.float32, -bound, bound)
        self.in_proj_bias = jnp.zeros((3 * E,), jnp.float32)
        # out_proj: nn.Linear default weight init, bias constant 0 (per module __init__)
        lim = 1.0 / math.sqrt(E)
        self.out_proj_weight = jax.random.uniform(
            k2, (E, E), jnp.float32, -lim, lim)
        self.out_proj_bias = jnp.zeros((E,), jnp.float32)

        # pre-transposed, pre-cast weights (done once, outside the hot path)
        cd = compute_dtype
        self.wqkv_t = jnp.asarray(self.in_proj_weight.T, cd)          # (E, 3E)
        self.wq_t = jnp.asarray(self.in_proj_weight[:E].T, cd)
        self.wk_t = jnp.asarray(self.in_proj_weight[E:2 * E].T, cd)
        self.wv_t = jnp.asarray(self.in_proj_weight[2 * E:].T, cd)
        self.wout_t = jnp.asarray(self.out_proj_weight.T, cd)

    def __call__(self, q, k, v, attn_mask=None, key_padding_mask=None):
        tsz, bsz, E = q.shape
        ssz = k.shape[0]
        H = self.num_heads
        D = E // H
        scaling = float(D) ** (-0.5)
        cd = self.compute_dtype

        if (q is k) and (k is v):
            # fused QKV projection: one matmul against the full (E, 3E) weight
            qkv = linear(q.reshape(tsz * bsz, E), self.wqkv_t,
                         self.in_proj_bias, out_dtype=cd)              # (T*B, 3E)
            qkv = qkv.reshape(tsz, bsz, 3, H, D).transpose(2, 1, 3, 0, 4)
            qh, kh, vh = qkv[0], qkv[1], qkv[2]                        # (B, H, T, D)
        else:
            qp = linear(q.reshape(tsz * bsz, E), self.wq_t,
                        self.in_proj_bias[:E], out_dtype=cd)
            kp = linear(k.reshape(ssz * bsz, E), self.wk_t,
                        self.in_proj_bias[E:2 * E], out_dtype=cd)
            vp = linear(v.reshape(ssz * bsz, E), self.wv_t,
                        self.in_proj_bias[2 * E:], out_dtype=cd)
            qh = qp.reshape(tsz, bsz, H, D).transpose(1, 2, 0, 3)      # (B, H, T, D)
            kh = kp.reshape(ssz, bsz, H, D).transpose(1, 2, 0, 3)
            vh = vp.reshape(ssz, bsz, H, D).transpose(1, 2, 0, 3)

        # small additive masks only (no (B*H, T, S) mask ever built in HBM)
        am = (jnp.zeros((tsz, ssz), jnp.float32) if attn_mask is None
              else attn_mask.astype(jnp.float32))
        kpm = (jnp.zeros((bsz, 1, ssz), jnp.float32) if key_padding_mask is None
               else key_padding_mask.astype(jnp.float32).reshape(bsz, 1, ssz))

        attn = flash_attention(qh, kh, vh, am, kpm, scaling)           # (B, H, T, D)

        attn = attn.transpose(2, 0, 1, 3).reshape(tsz * bsz, E)        # (T*B, E)
        out = linear(attn, self.wout_t, self.out_proj_bias, out_dtype=jnp.float32)
        return out.reshape(tsz, bsz, E), None


# ----------------------------------------------------------------------------
# Pure-JAX fp32 reference (mirrors the PyTorch module's forward)
# ----------------------------------------------------------------------------
def _reference(mha, q, k, v, attn_mask, key_padding_mask):
    tsz, bsz, E = q.shape
    ssz = k.shape[0]
    H, D = mha.num_heads, E // mha.num_heads
    scaling = float(D) ** (-0.5)
    W, b = mha.in_proj_weight, mha.in_proj_bias
    qp = q.reshape(-1, E) @ W[:E].T + b[:E]
    kp = k.reshape(-1, E) @ W[E:2 * E].T + b[E:2 * E]
    vp = v.reshape(-1, E) @ W[2 * E:].T + b[2 * E:]
    qp = qp * scaling
    qh = qp.reshape(tsz, bsz * H, D).transpose(1, 0, 2)
    kh = kp.reshape(ssz, bsz * H, D).transpose(1, 0, 2)
    vh = vp.reshape(ssz, bsz * H, D).transpose(1, 0, 2)
    mask = jnp.zeros((bsz * H, tsz, ssz), jnp.float32)
    if attn_mask is not None:
        mask = mask + jnp.broadcast_to(
            attn_mask[None, None], (bsz, H, tsz, ssz)).reshape(-1, tsz, ssz)
    if key_padding_mask is not None:
        mask = mask + jnp.broadcast_to(
            key_padding_mask[:, None, None, :], (bsz, H, tsz, ssz)).reshape(-1, tsz, ssz)
    s = jnp.einsum("btd,bsd->bts", qh, kh) + mask
    p = jax.nn.softmax(s, axis=-1)
    o = jnp.einsum("bts,bsd->btd", p, vh)
    o = o.transpose(1, 0, 2).reshape(tsz * bsz, E)
    return (o @ mha.out_proj_weight.T + mha.out_proj_bias).reshape(tsz, bsz, E)


if __name__ == "__main__":
    key = jax.random.PRNGKey(0)
    kx, kk2, kv2, kparam = jax.random.split(key, 4)

    tsz, bsz, embed_dim, num_heads = 8, 2, 32, 4
    mha = MultiheadAttentionPallas(embed_dim, num_heads, kparam)

    # --- self-attention (fused-QKV path): causal mask + key-padding mask ---
    x = jax.random.normal(kx, (tsz, bsz, embed_dim), jnp.float32)
    attn_mask = jnp.where(
        jnp.arange(tsz)[:, None] < jnp.arange(tsz)[None, :], -1e9, 0.0
    ).astype(jnp.float32)                                    # (T, S) causal, additive
    key_padding_mask = jnp.zeros((bsz, tsz), jnp.float32).at[:, -1].set(-1e9)

    out, _ = mha(x, x, x, attn_mask=attn_mask, key_padding_mask=key_padding_mask)
    out = jax.block_until_ready(out)
    ref = _reference(mha, x, x, x, attn_mask, key_padding_mask)
    assert jnp.allclose(out, ref, atol=5e-2, rtol=5e-2), "self-attention mismatch"

    # --- cross-attention (separate-projection path), rectangular T != S ---
    ssz = 16
    k_in = jax.random.normal(kk2, (ssz, bsz, embed_dim), jnp.float32)
    v_in = jax.random.normal(kv2, (ssz, bsz, embed_dim), jnp.float32)
    kpm2 = jnp.zeros((bsz, ssz), jnp.float32).at[0, -3:].set(-1e9)

    out2, _ = mha(x, k_in, v_in, attn_mask=None, key_padding_mask=kpm2)
    out2 = jax.block_until_ready(out2)
    ref2 = _reference(mha, x, k_in, v_in, None, kpm2)
    assert jnp.allclose(out2, ref2, atol=5e-2, rtol=5e-2), "cross-attention mismatch"

    print("KERNEL_OK")
</pallas_src>

<mosaic_0001>
module attributes {stable_mosaic.version = 11 : i64} {
  func.func @_linear_kernel(%arg0: i32, %arg1: memref<16x32xf32, #tpu.memory_space<vmem>>, %arg2: memref<32x96xbf16, #tpu.memory_space<vmem>>, %arg3: memref<1x96xf32, #tpu.memory_space<vmem>>, %arg4: memref<16x96xbf16, #tpu.memory_space<vmem>>) attributes {dimension_semantics = [#tpu.dimension_semantics<parallel>], iteration_bounds = array<i64: 1>, scalar_prefetch = 0 : i64, scratch_operands = 0 : i64, tpu.core_type = #tpu.core_type<tc>, window_params = [{transform_indices = @transform_0, window_bounds = array<i64: 16, 32>}, {pipeline_mode = #tpu.pipeline_mode<synchronous>, transform_indices = @transform_1, window_bounds = array<i64: 32, 96>}, {pipeline_mode = #tpu.pipeline_mode<synchronous>, transform_indices = @transform_2, window_bounds = array<i64: 1, 96>}, {transform_indices = @transform_3, window_bounds = array<i64: 16, 96>}]} {
    %c0 = arith.constant 0 : index
    %c0_0 = arith.constant 0 : index
    %0 = vector.load %arg1[%c0, %c0_0] : memref<16x32xf32, #tpu.memory_space<vmem>>, vector<16x32xf32>
    %1 = arith.truncf %0 : vector<16x32xf32> to vector<16x32xbf16>
    %c0_1 = arith.constant 0 : index
    %c0_2 = arith.constant 0 : index
    %2 = vector.load %arg2[%c0_1, %c0_2] : memref<32x96xbf16, #tpu.memory_space<vmem>>, vector<32x96xbf16>
    %cst = arith.constant dense<0.000000e+00> : vector<16x96xf32>
    %3 = tpu.matmul %1, %2, %cst {dimension_numbers = #tpu.dot_dimension_numbers<[1], [0], [0], [1], [0, 0, 1, 1], [], []>} : vector<16x32xbf16>, vector<32x96xbf16>, vector<16x96xf32> -> vector<16x96xf32>
    %c0_3 = arith.constant 0 : index
    %c0_4 = arith.constant 0 : index
    %4 = vector.load %arg3[%c0_3, %c0_4] : memref<1x96xf32, #tpu.memory_space<vmem>>, vector<1x96xf32>
    %5 = vector.broadcast %4 : vector<1x96xf32> to vector<16x96xf32>
    %6 = arith.addf %3, %5 : vector<16x96xf32>
    %7 = arith.truncf %6 : vector<16x96xf32> to vector<16x96xbf16>
    %c0_5 = arith.constant 0 : index
    %c0_6 = arith.constant 0 : index
    %8 = vector.load %arg4[%c0_5, %c0_6] : memref<16x96xbf16, #tpu.memory_space<vmem>>, vector<16x96xbf16>
    tpu.vector_store %arg4[%c0_5, %c0_6], %7 {strides = array<i32>} : memref<16x96xbf16, #tpu.memory_space<vmem>>, vector<16x96xbf16>,
    return
  }
  func.func @transform_0(%arg0: i32) -> (i32, i32) {
    %c0_i32 = arith.constant 0 : i32
    %c0_i32_0 = arith.constant 0 : i32
    return %arg0, %c0_i32 : i32, i32
  }
  func.func @transform_1(%arg0: i32) -> (i32, i32) {
    %c0_i32 = arith.constant 0 : i32
    %c0_i32_0 = arith.constant 0 : i32
    %c0_i32_1 = arith.constant 0 : i32
    return %c0_i32, %c0_i32_0 : i32, i32
  }
  func.func @transform_2(%arg0: i32) -> (i32, i32) {
    %c0_i32 = arith.constant 0 : i32
    %c0_i32_0 = arith.constant 0 : i32
    %c0_i32_1 = arith.constant 0 : i32
    return %c0_i32, %c0_i32_0 : i32, i32
  }
  func.func @transform_3(%arg0: i32) -> (i32, i32) {
    %c0_i32 = arith.constant 0 : i32
    %c0_i32_0 = arith.constant 0 : i32
    return %arg0, %c0_i32 : i32, i32
  }
}

</mosaic_0001>

<llo_original>
// kernel: tpu_custom_call.1
$region0: #{tpu_custom_call.1}
  #allocation0 [shape = 'u32[]', space=smem, size = 0x4, offset = 0x4, fixed_abs, tag = 'smem constant byte address 0x4 - core index']
  #allocation1 [shape = 'u32[144,128]{1,0:T(1,128)}', space=vmem, size = 0x12000, scoped, tag = 'internal scratch']
  %s0 = inlined_call_operand.hbm [shape: f32[16,32], index: 0, kind: input, shape index: {}]
  %s1 = inlined_call_operand.hbm [shape: bf16[32,96], index: 1, kind: input, shape index: {}]
  %s2 = inlined_call_operand.vmem [shape: f32[1,96], index: 2, kind: input, shape index: {}]
  %s3 = inlined_call_operand.hbm [shape: bf16[16,96], index: 3, kind: output, shape index: {}]
  %s4 = sld [smem:[#allocation0]]
  $region30: #{tpu_custom_call.1} parent=0
    _
  %s6 = ssub.s32 1, %s4
  %s7 = scalar_select 0, %s6, %s4
  $region1: #{tpu_custom_call.1} parent=0
    #allocation2 [shape = 'u8[8192]{0}', space=vmem, size = 0x2000, scoped, tag = 'input window, operand 0, single buffered']
    #allocation3 [shape = 's32[1]{0}', space=sflag, size = 0x4, scoped, tag = 'scoped memory for tpu_custom_call.1']
    #allocation4 [shape = 's32[1]{0}', space=sflag, size = 0x4, scoped, tag = 'scoped memory for tpu_custom_call.1']
    #allocation5 [shape = 'u8[8192]{0}', space=vmem, size = 0x2000, scoped, tag = 'input window, operand 1, single buffered']
    #allocation6 [shape = 's32[1]{0}', space=sflag, size = 0x4, scoped, tag = 'scoped memory for tpu_custom_call.1']
    #allocation7 [shape = 'u8[4096]{0}', space=vmem, size = 0x1000, scoped, tag = 'output window, operand 0, single buffered']
    %8 = vsyncpa [#allocation3], 0
    %9 = vsyncpa [#allocation6], 0
    %10 = vsyncpa [#allocation4], 0
    // Predicated region
    $region2: #{tpu_custom_call.1} parent=1 // pred_check
      _
    $region3: #{tpu_custom_call.1} parent=1 // pred_check_branch
      %12 = sbr.rel (0) target = $region5
    $region4: #{tpu_custom_call.1} parent=1 // pred_region
      %s14 = ssub.s32 256, 256
      %15 = vsyncadd [#allocation3], %s14
      %s16 = sshll.u32 [#allocation2], 4
      %s17 = int_to_ptr.vmem [resolvable:$true] %s16
      %22 = dma.hbm_to_vmem [thread:$0]  %s0, 256, %s17, [#allocation3], 128, 128, 8
    $region5: #{tpu_custom_call.1} parent=1 // pred_fallthru
      _
    // Predicated region
    $region6: #{tpu_custom_call.1} parent=1 // pred_check
      _
    $region7: #{tpu_custom_call.1} parent=1 // pred_check_branch
      %24 = sbr.rel (0) target = $region9
    $region8: #{tpu_custom_call.1} parent=1 // pred_region
      %s26 = ssub.s32 256, 256
      %27 = vsyncadd [#allocation6], %s26
      %s28 = sshll.u32 [#allocation5], 4
      %s29 = int_to_ptr.vmem [resolvable:$true] %s28
      %34 = dma.hbm_to_vmem [thread:$0]  %s1, 256, %s29, [#allocation6], 64, 64, 4
    $region9: #{tpu_custom_call.1} parent=1 // pred_fallthru
      _
    // Predicated region
    $region10: #{tpu_custom_call.1} parent=1 // pred_check
      _
    $region11: #{tpu_custom_call.1} parent=1 // pred_check_branch
      %36 = sbr.rel (0) target = $region13
    $region12: #{tpu_custom_call.1} parent=1 // pred_region
      _
    $region13: #{tpu_custom_call.1} parent=1 // pred_fallthru
      _
    // Predicated region
    $region14: #{tpu_custom_call.1} parent=1 // pred_check
      _
    $region15: #{tpu_custom_call.1} parent=1 // pred_check_branch
      %38 = sbr.rel (0) target = $region17
    $region16: #{tpu_custom_call.1} parent=1 // pred_region
      %39 = dma.done [#allocation3], 256
    $region17: #{tpu_custom_call.1} parent=1 // pred_fallthru
      _
    // Predicated region
    $region18: #{tpu_custom_call.1} parent=1 // pred_check
      _
    $region19: #{tpu_custom_call.1} parent=1 // pred_check_branch
      %41 = sbr.rel (0) target = $region21
    $region20: #{tpu_custom_call.1} parent=1 // pred_region
      %42 = dma.done [#allocation6], 256
    $region21: #{tpu_custom_call.1} parent=1 // pred_fallthru
      _
    %v44 = vld [vmem:[#allocation2] sm:$0xff]
    %v45 = vld [vmem:[#allocation2 + $0x8] sm:$0xff]
    %v46 = vpack.c.bf16 %v45, %v44
    %v47 = vld [vmem:[#allocation5] sm:$0xf]
    %v48 = vld [vmem:[#allocation5 + $0x4] sm:$0xf]
    %v49 = vld [vmem:[#allocation5 + $0x8] sm:$0xf]
    %v50 = vld [vmem:[#allocation5 + $0xc] sm:$0xf]
    %v51 = vld [vmem:[%s2] sm:$0x1]
    %v53 = vlaneseq
    %v54 = vshrl.u32 %v53, 7
    %v55 = vsub.s32 0, %v54
    %v56 = vrot.slane %v51, %v55
    %v62 = vunpack.c.l.b16 %v47
    %v63 = vunpack.c.l.b16 %v48
    %v64 = vunpack.c.l.b16 %v49
    %v65 = vunpack.c.l.b16 %v50
    %v66 = vpack.c.b16 %v63, %v62
    %v67 = vpack.c.b16 %v65, %v64
    %vm70 = vcmask 261120
    %v72 = vsel %vm70, %v46, 0
    %74 = vmatprep.subr.bf16.mxu0 0
    %75 = vmatpush1.bf16.msra.mxu0 %v66
    %76 = vmatprep.subr.bf16.mxu0 0
    %77 = vmatpush1.bf16.msra.mxu0 %v67
    %78 = vmatprep.subr.bf16.mxu0 0
    %79 = vmatpush1.bf16.msra.mxu0 0
    %80 = vmatprep.subr.bf16.mxu0 0
    %81 = vmatpush1.bf16.msra.mxu0 0
    %82 = vmatprep.subr.bf16.mxu0 0
    %83 = vmatpush1.bf16.msra.mxu0 0
    %84 = vmatprep.subr.bf16.mxu0 0
    %85 = vmatpush1.bf16.msra.mxu0 0
    %86 = vmatprep.subr.bf16.mxu0 0
    %87 = vmatpush1.bf16.msra.mxu0 0
    %88 = vmatprep.subr.bf16.mxu0 0
    %89 = vmatpush1.bf16.msra.mxu0 0
    %90 = vmatprep.subr.bf16.mxu0 0
    %91 = vmatpush1.bf16.msra.mxu0 0
    %92 = vmatprep.subr.bf16.mxu0 0
    %93 = vmatpush1.bf16.msra.mxu0 0
    %94 = vmatprep.subr.bf16.mxu0 0
    %95 = vmatpush1.bf16.msra.mxu0 0
    %96 = vmatprep.subr.bf16.mxu0 0
    %97 = vmatpush1.bf16.msra.mxu0 0
    %98 = vmatprep.subr.bf16.mxu0 0
    %99 = vmatpush1.bf16.msra.mxu0 0
    %100 = vmatprep.subr.bf16.mxu0 0
    %101 = vmatpush1.bf16.msra.mxu0 0
    %102 = vmatprep.subr.bf16.mxu0 0
    %103 = vmatpush1.bf16.msra.mxu0 0
    %104 = vmatprep.subr.bf16.mxu0 0
    %105 = vmatpush1.bf16.msra.mxu0 0
    %106 = vmatprep.mubr.bf16.mxu0 0
    %107 = vmatmul.mubr.bf16.gmra.mrb[0].mxu0 %v72
    %v108 = vpop.f32.mrb[0].mxu0
    %v109 = vadd.f32 %v56, %v108
    %v110 = vpop.f32.mrb[0].mxu0
    %v111 = vpop.f32.mrb[0].mxu0
    %v112 = vadd.f32 %v56, %v111
    %v113 = vpop.f32.mrb[0].mxu0
    %114 = vdwg.mxu0
    %v115 = vpack.c.bf16 %v112, %v109
    %v117 = vunpack.c.l.b16 %v115
    %v118 = vunpack.c.h.b16 %v115
    %v119 = vpack.c.b16 %v117, %v117
    %v120 = vpack.c.b16 %v118, %v118
    %vm123 = vcmask 781312
    %124 = vst.msk [vmem:[#allocation7] sm:$0xf] %vm123, %v119
    %125 = vst.msk [vmem:[#allocation7 + $0x4] sm:$0xf] %vm123, %v120
    // Predicated region
    $region22: #{tpu_custom_call.1} parent=1 // pred_check
      _
    $region23: #{tpu_custom_call.1} parent=1 // pred_check_branch
      %127 = sbr.rel (0) target = $region25
    $region24: #{tpu_custom_call.1} parent=1 // pred_region
      %s129 = ssub.s32 128, 128
      %130 = vsyncadd [#allocation4], %s129
      %s131 = sshll.u32 [#allocation7], 4
      %s132 = int_to_ptr.vmem [resolvable:$true] %s131
      %137 = dma.vmem_to_hbm [thread:$0]  %s132, 128, %s3, [#allocation4], 64, 64, 4
    $region25: #{tpu_custom_call.1} parent=1 // pred_fallthru
      _
    // Predicated region
    $region26: #{tpu_custom_call.1} parent=1 // pred_check
      _
    $region27: #{tpu_custom_call.1} parent=1 // pred_check_branch
      %139 = sbr.rel (0) target = $region29
    $region28: #{tpu_custom_call.1} parent=1 // pred_region
      %140 = dma.done [#allocation4], 128
    $region29: #{tpu_custom_call.1} parent=1 // pred_fallthru
      _
    %141 = vsyncpa [#allocation3], 1
    %142 = vsyncpa [#allocation6], 1
    %143 = vsyncpa [#allocation4], 1

</llo_original>
